<compile_context>
chip_gen: v7x
topology: tpu7x:2x2x1
jax: 0.10.0
libtpu: 0.0.40
codegen_flags: <defaults>
</compile_context>

<pallas_src>
import jax
import jax.numpy as jnp
from jax.experimental import pallas as pl
from jax.experimental.pallas import tpu as pltpu

STATE_SIZE = 26
HIDDEN_SIZE = 128
ACTION_SIZE = 50
HEAD_PAD = 128      # fused [mu || std || zeros] head width (lane-dense output)
ROW_ALIGN = 16      # batch-row granularity (bf16 packs 16 rows per vreg)


def actor_kernel(x_ref, w1_ref, b1_ref, w2_ref, b2_ref, wh_ref, bh_ref, out_ref):
    x = x_ref[...]                                     # (tile_b, 26) bf16

    # Layer 1: Linear(state -> hidden) + ReLU   (bf16 MXU operands, f32 acc)
    h1 = jnp.dot(x, w1_ref[...], preferred_element_type=jnp.float32) + b1_ref[...]
    h1 = jnp.maximum(h1, 0.0).astype(jnp.bfloat16)

    # Layer 2: Linear(hidden -> hidden) + ReLU
    h2 = jnp.dot(h1, w2_ref[...], preferred_element_type=jnp.float32) + b2_ref[...]
    h2 = jnp.maximum(h2, 0.0).astype(jnp.bfloat16)

    # Fused heads: one matmul over [Wmu | Wstd | 0] -> (tile_b, 128)
    z = jnp.dot(h2, wh_ref[...], preferred_element_type=jnp.float32) + bh_ref[...]

    mu = jnp.clip(z, -5.0, 5.0)                        # lanes [0, 50)
    std = jnp.exp(jnp.tanh(z))                         # lanes [50, 100)

    lane = jax.lax.broadcasted_iota(jnp.int32, (1, HEAD_PAD), 1)
    out_ref[...] = jnp.where(lane < ACTION_SIZE, mu, std).astype(out_ref.dtype)


def _round_up(n, m):
    return ((n + m - 1) // m) * m


def pack_params(params, *, compute_dtype=jnp.bfloat16):
    """One-time prep: cast weights to the MXU operand dtype and fuse the
    mu/std heads into one zero-padded (128, 128) weight.  Biases stay f32."""
    w1, b1, w2, b2, wmu, bmu, wstd, bstd = params
    f32 = jnp.float32
    wh = jnp.zeros((HIDDEN_SIZE, HEAD_PAD), compute_dtype)
    wh = wh.at[:, :ACTION_SIZE].set(wmu.astype(compute_dtype))
    wh = wh.at[:, ACTION_SIZE:2 * ACTION_SIZE].set(wstd.astype(compute_dtype))
    bh = jnp.zeros((1, HEAD_PAD), f32)
    bh = bh.at[:, :ACTION_SIZE].set(bmu.astype(f32))
    bh = bh.at[:, ACTION_SIZE:2 * ACTION_SIZE].set(bstd.astype(f32))
    return (w1.astype(compute_dtype),
            b1.astype(f32).reshape(1, HIDDEN_SIZE),
            w2.astype(compute_dtype),
            b2.astype(f32).reshape(1, HIDDEN_SIZE),
            wh, bh)


def actor_forward_fused(x, packed, *, tile_b=2048, out_dtype=jnp.float32):
    """x: (B, STATE_SIZE) f32.  Returns the fused activation slab (B, 128):
    lanes [0,50) = mu, [50,100) = std, [100,128) = padding."""
    B = x.shape[0]
    w1, b1, w2, b2, wh, bh = packed
    compute_dtype = w1.dtype

    # --- batch tiling: aim for >= 2 grid steps so v7x's 2 TCs both get work ---
    b_al = _round_up(B, ROW_ALIGN)
    half = _round_up(-(-b_al // 2), ROW_ALIGN)
    tile_b = max(ROW_ALIGN, min(_round_up(tile_b, ROW_ALIGN), half))
    b_pad = _round_up(B, tile_b)
    grid = (b_pad // tile_b,)

    # Cast to bf16; pad the batch only when the tile does not divide B.
    xc = x.astype(compute_dtype)
    if b_pad != B:
        xc = jnp.pad(xc, ((0, b_pad - B), (0, 0)))

    resident = lambda shape: pl.BlockSpec(shape, lambda i: (0, 0))

    out_itemsize = jnp.dtype(out_dtype).itemsize
    in_itemsize = jnp.dtype(compute_dtype).itemsize
    cost = pl.CostEstimate(
        flops=2 * b_pad * (STATE_SIZE * HIDDEN_SIZE
                           + HIDDEN_SIZE * HIDDEN_SIZE
                           + HIDDEN_SIZE * HEAD_PAD),
        transcendentals=2 * b_pad * HEAD_PAD,
        bytes_accessed=(b_pad * STATE_SIZE * in_itemsize
                        + b_pad * HEAD_PAD * out_itemsize
                        + int(w1.size) * in_itemsize + int(b1.size) * 4
                        + int(w2.size) * in_itemsize + int(b2.size) * 4
                        + int(wh.size) * in_itemsize + int(bh.size) * 4),
    )

    out = pl.pallas_call(
        actor_kernel,
        out_shape=jax.ShapeDtypeStruct((b_pad, HEAD_PAD), out_dtype),
        grid_spec=pltpu.PrefetchScalarGridSpec(
            num_scalar_prefetch=0,
            grid=grid,
            in_specs=[
                pl.BlockSpec((tile_b, STATE_SIZE), lambda i: (i, 0)),   # x tile (bf16)
                resident((STATE_SIZE, HIDDEN_SIZE)),                    # W1 (bf16)
                resident((1, HIDDEN_SIZE)),                             # b1 (f32)
                resident((HIDDEN_SIZE, HIDDEN_SIZE)),                   # W2 (bf16)
                resident((1, HIDDEN_SIZE)),                             # b2 (f32)
                resident((HIDDEN_SIZE, HEAD_PAD)),                      # W_heads (bf16)
                resident((1, HEAD_PAD)),                                # b_heads (f32)
            ],
            out_specs=pl.BlockSpec((tile_b, HEAD_PAD), lambda i: (i, 0)),
        ),
        # Default 32 MiB scoped VMEM is ample up to tile_b ~ 8192 (~20 MiB peak
        # incl. double-buffered x/out + f32 intermediates); set
        # vmem_limit_bytes= here if sweeping tiles beyond that on v7x.
        compiler_params=pltpu.CompilerParams(
            dimension_semantics=("parallel",)),
        cost_estimate=cost,
    )(xc, w1, b1, w2, b2, wh, bh)

    return out[:B] if b_pad != B else out


def actor_forward(x, params, *, tile_b=2048, out_dtype=jnp.float32):
    """nn.Module-compatible API: returns (mu, std), each (B, ACTION_SIZE).
    NOTE: the two slices are extra XLA copies over the output slab; hot-path
    callers should consume actor_forward_fused() directly."""
    slab = actor_forward_fused(x, pack_params(params), tile_b=tile_b,
                               out_dtype=out_dtype)
    return slab[:, :ACTION_SIZE], slab[:, ACTION_SIZE:2 * ACTION_SIZE]


def init_params(key):
    """Deterministic init mimicking torch.nn.Linear (uniform +-1/sqrt(fan_in)).
    Weights stored as (in, out); biases as (1, out); all f32."""
    def linear(k, fan_in, fan_out):
        kw, kb = jax.random.split(k)
        bound = 1.0 / jnp.sqrt(fan_in)
        w = jax.random.uniform(kw, (fan_in, fan_out), jnp.float32, -bound, bound)
        b = jax.random.uniform(kb, (1, fan_out), jnp.float32, -bound, bound)
        return w, b

    k1, k2, k3, k4 = jax.random.split(key, 4)
    w1, b1 = linear(k1, STATE_SIZE, HIDDEN_SIZE)
    w2, b2 = linear(k2, HIDDEN_SIZE, HIDDEN_SIZE)
    wmu, bmu = linear(k3, HIDDEN_SIZE, ACTION_SIZE)
    wstd, bstd = linear(k4, HIDDEN_SIZE, ACTION_SIZE)
    return (w1, b1, w2, b2, wmu, bmu, wstd, bstd)


def actor_reference(x, params):
    """Pure-JAX f32 reference matching the PyTorch Actor.forward."""
    w1, b1, w2, b2, wmu, bmu, wstd, bstd = params
    h1 = jnp.maximum(x @ w1 + b1, 0.0)
    h2 = jnp.maximum(h1 @ w2 + b2, 0.0)
    mu = jnp.clip(h2 @ wmu + bmu, -5.0, 5.0)
    std = jnp.exp(jnp.tanh(h2 @ wstd + bstd))
    return mu, std


if __name__ == "__main__":
    key = jax.random.PRNGKey(0)
    kp, kx1, kx2 = jax.random.split(key, 3)
    params = init_params(kp)
    packed = pack_params(params)

    # Small test: single tile, fused-slab (performance) API.
    B = 8
    x = jax.random.normal(kx1, (B, STATE_SIZE), jnp.float32)
    slab = actor_forward_fused(x, packed)
    jax.block_until_ready(slab)
    assert slab.shape == (B, HEAD_PAD)
    mu = slab[:, :ACTION_SIZE]
    std = slab[:, ACTION_SIZE:2 * ACTION_SIZE]
    mu_ref, std_ref = actor_reference(x, params)
    # bf16 MXU operands -> compare against the f32 reference with bf16-level tol.
    assert jnp.allclose(mu, mu_ref, atol=5e-2, rtol=5e-2)
    assert jnp.allclose(std, std_ref, atol=5e-2, rtol=5e-2)

    # Ragged batch: exercises batch padding + multi-step "parallel" grid,
    # via the nn.Module-compatible (mu, std) API.
    B2 = 37
    x2 = jax.random.normal(kx2, (B2, STATE_SIZE), jnp.float32)
    mu2, std2 = actor_forward(x2, params, tile_b=16)       # grid = (3,)
    jax.block_until_ready((mu2, std2))
    mu2_ref, std2_ref = actor_reference(x2, params)
    assert mu2.shape == (B2, ACTION_SIZE) and std2.shape == (B2, ACTION_SIZE)
    assert jnp.allclose(mu2, mu2_ref, atol=5e-2, rtol=5e-2)
    assert jnp.allclose(std2, std2_ref, atol=5e-2, rtol=5e-2)

    print("KERNEL_OK")
</pallas_src>

<mosaic_0001>
module attributes {stable_mosaic.version = 11 : i64} {
  func.func @actor_kernel(%arg0: i32, %arg1: memref<16x26xbf16, #tpu.memory_space<vmem>>, %arg2: memref<26x128xbf16, #tpu.memory_space<vmem>>, %arg3: memref<1x128xf32, #tpu.memory_space<vmem>>, %arg4: memref<128x128xbf16, #tpu.memory_space<vmem>>, %arg5: memref<1x128xf32, #tpu.memory_space<vmem>>, %arg6: memref<128x128xbf16, #tpu.memory_space<vmem>>, %arg7: memref<1x128xf32, #tpu.memory_space<vmem>>, %arg8: memref<16x128xf32, #tpu.memory_space<vmem>>) attributes {dimension_semantics = [#tpu.dimension_semantics<parallel>], iteration_bounds = array<i64: 1>, scalar_prefetch = 0 : i64, scratch_operands = 0 : i64, tpu.core_type = #tpu.core_type<tc>, window_params = [{transform_indices = @transform_0, window_bounds = array<i64: 16, 26>}, {pipeline_mode = #tpu.pipeline_mode<synchronous>, transform_indices = @transform_1, window_bounds = array<i64: 26, 128>}, {pipeline_mode = #tpu.pipeline_mode<synchronous>, transform_indices = @transform_2, window_bounds = array<i64: 1, 128>}, {pipeline_mode = #tpu.pipeline_mode<synchronous>, transform_indices = @transform_3, window_bounds = array<i64: 128, 128>}, {pipeline_mode = #tpu.pipeline_mode<synchronous>, transform_indices = @transform_4, window_bounds = array<i64: 1, 128>}, {pipeline_mode = #tpu.pipeline_mode<synchronous>, transform_indices = @transform_5, window_bounds = array<i64: 128, 128>}, {pipeline_mode = #tpu.pipeline_mode<synchronous>, transform_indices = @transform_6, window_bounds = array<i64: 1, 128>}, {transform_indices = @transform_7, window_bounds = array<i64: 16, 128>}]} {
    %c0 = arith.constant 0 : index
    %c0_0 = arith.constant 0 : index
    %0 = vector.load %arg1[%c0, %c0_0] : memref<16x26xbf16, #tpu.memory_space<vmem>>, vector<16x26xbf16>
    %c0_1 = arith.constant 0 : index
    %c0_2 = arith.constant 0 : index
    %1 = vector.load %arg2[%c0_1, %c0_2] : memref<26x128xbf16, #tpu.memory_space<vmem>>, vector<26x128xbf16>
    %cst = arith.constant dense<0.000000e+00> : vector<16x128xf32>
    %2 = tpu.matmul %0, %1, %cst {dimension_numbers = #tpu.dot_dimension_numbers<[1], [0], [0], [1], [0, 0, 1, 1], [], []>} : vector<16x26xbf16>, vector<26x128xbf16>, vector<16x128xf32> -> vector<16x128xf32>
    %c0_3 = arith.constant 0 : index
    %c0_4 = arith.constant 0 : index
    %3 = vector.load %arg3[%c0_3, %c0_4] : memref<1x128xf32, #tpu.memory_space<vmem>>, vector<1x128xf32>
    %4 = vector.broadcast %3 : vector<1x128xf32> to vector<16x128xf32>
    %5 = arith.addf %2, %4 : vector<16x128xf32>
    %cst_5 = arith.constant 0.000000e+00 : f32
    %6 = vector.broadcast %cst_5 : f32 to vector<16x128xf32>
    %7 = arith.maximumf %5, %6 : vector<16x128xf32>
    %8 = arith.truncf %7 : vector<16x128xf32> to vector<16x128xbf16>
    %c0_6 = arith.constant 0 : index
    %c0_7 = arith.constant 0 : index
    %9 = vector.load %arg4[%c0_6, %c0_7] : memref<128x128xbf16, #tpu.memory_space<vmem>>, vector<128x128xbf16>
    %cst_8 = arith.constant dense<0.000000e+00> : vector<16x128xf32>
    %10 = tpu.matmul %8, %9, %cst_8 {dimension_numbers = #tpu.dot_dimension_numbers<[1], [0], [0], [1], [0, 0, 1, 1], [], []>} : vector<16x128xbf16>, vector<128x128xbf16>, vector<16x128xf32> -> vector<16x128xf32>
    %c0_9 = arith.constant 0 : index
    %c0_10 = arith.constant 0 : index
    %11 = vector.load %arg5[%c0_9, %c0_10] : memref<1x128xf32, #tpu.memory_space<vmem>>, vector<1x128xf32>
    %12 = vector.broadcast %11 : vector<1x128xf32> to vector<16x128xf32>
    %13 = arith.addf %10, %12 : vector<16x128xf32>
    %cst_11 = arith.constant 0.000000e+00 : f32
    %14 = vector.broadcast %cst_11 : f32 to vector<16x128xf32>
    %15 = arith.maximumf %13, %14 : vector<16x128xf32>
    %16 = arith.truncf %15 : vector<16x128xf32> to vector<16x128xbf16>
    %c0_12 = arith.constant 0 : index
    %c0_13 = arith.constant 0 : index
    %17 = vector.load %arg6[%c0_12, %c0_13] : memref<128x128xbf16, #tpu.memory_space<vmem>>, vector<128x128xbf16>
    %cst_14 = arith.constant dense<0.000000e+00> : vector<16x128xf32>
    %18 = tpu.matmul %16, %17, %cst_14 {dimension_numbers = #tpu.dot_dimension_numbers<[1], [0], [0], [1], [0, 0, 1, 1], [], []>} : vector<16x128xbf16>, vector<128x128xbf16>, vector<16x128xf32> -> vector<16x128xf32>
    %c0_15 = arith.constant 0 : index
    %c0_16 = arith.constant 0 : index
    %19 = vector.load %arg7[%c0_15, %c0_16] : memref<1x128xf32, #tpu.memory_space<vmem>>, vector<1x128xf32>
    %20 = vector.broadcast %19 : vector<1x128xf32> to vector<16x128xf32>
    %21 = arith.addf %18, %20 : vector<16x128xf32>
    %cst_17 = arith.constant -5.000000e+00 : f32
    %cst_18 = arith.constant 5.000000e+00 : f32
    %22 = vector.broadcast %cst_17 : f32 to vector<16x128xf32>
    %23 = arith.maximumf %22, %21 : vector<16x128xf32>
    %24 = vector.broadcast %cst_18 : f32 to vector<16x128xf32>
    %25 = arith.minimumf %24, %23 : vector<16x128xf32>
    %26 = math.tanh %21 : vector<16x128xf32>
    %27 = math.exp %26 : vector<16x128xf32>
    %28 = tpu.iota {dimensions = array<i32: 1>} : vector<1x128xi32>
    %c50_i32 = arith.constant 50 : i32
    %29 = vector.broadcast %c50_i32 : i32 to vector<1x128xi32>
    %30 = arith.cmpi slt, %28, %29 : vector<1x128xi32>
    %31 = vector.shape_cast %30 : vector<1x128xi1> to vector<1x128xi1>
    %32 = vector.broadcast %31 : vector<1x128xi1> to vector<16x128xi1>
    %33 = arith.select %32, %25, %27 : vector<16x128xi1>, vector<16x128xf32>
    %c0_19 = arith.constant 0 : index
    %c0_20 = arith.constant 0 : index
    %34 = vector.load %arg8[%c0_19, %c0_20] : memref<16x128xf32, #tpu.memory_space<vmem>>, vector<16x128xf32>
    tpu.vector_store %arg8[%c0_19, %c0_20], %33 {strides = array<i32>} : memref<16x128xf32, #tpu.memory_space<vmem>>, vector<16x128xf32>,
    return
  }
  func.func @transform_0(%arg0: i32) -> (i32, i32) {
    %c0_i32 = arith.constant 0 : i32
    %c0_i32_0 = arith.constant 0 : i32
    return %arg0, %c0_i32 : i32, i32
  }
  func.func @transform_1(%arg0: i32) -> (i32, i32) {
    %c0_i32 = arith.constant 0 : i32
    %c0_i32_0 = arith.constant 0 : i32
    %c0_i32_1 = arith.constant 0 : i32
    return %c0_i32, %c0_i32_0 : i32, i32
  }
  func.func @transform_2(%arg0: i32) -> (i32, i32) {
    %c0_i32 = arith.constant 0 : i32
    %c0_i32_0 = arith.constant 0 : i32
    %c0_i32_1 = arith.constant 0 : i32
    return %c0_i32, %c0_i32_0 : i32, i32
  }
  func.func @transform_3(%arg0: i32) -> (i32, i32) {
    %c0_i32 = arith.constant 0 : i32
    %c0_i32_0 = arith.constant 0 : i32
    %c0_i32_1 = arith.constant 0 : i32
    return %c0_i32, %c0_i32_0 : i32, i32
  }
  func.func @transform_4(%arg0: i32) -> (i32, i32) {
    %c0_i32 = arith.constant 0 : i32
    %c0_i32_0 = arith.constant 0 : i32
    %c0_i32_1 = arith.constant 0 : i32
    return %c0_i32, %c0_i32_0 : i32, i32
  }
  func.func @transform_5(%arg0: i32) -> (i32, i32) {
    %c0_i32 = arith.constant 0 : i32
    %c0_i32_0 = arith.constant 0 : i32
    %c0_i32_1 = arith.constant 0 : i32
    return %c0_i32, %c0_i32_0 : i32, i32
  }
  func.func @transform_6(%arg0: i32) -> (i32, i32) {
    %c0_i32 = arith.constant 0 : i32
    %c0_i32_0 = arith.constant 0 : i32
    %c0_i32_1 = arith.constant 0 : i32
    return %c0_i32, %c0_i32_0 : i32, i32
  }
  func.func @transform_7(%arg0: i32) -> (i32, i32) {
    %c0_i32 = arith.constant 0 : i32
    %c0_i32_0 = arith.constant 0 : i32
    return %arg0, %c0_i32 : i32, i32
  }
}

</mosaic_0001>

<llo_original>
// kernel: tpu_custom_call.1
$region0: #{tpu_custom_call.1}
  #allocation0 [shape = 'u32[]', space=smem, size = 0x4, offset = 0x4, fixed_abs, tag = 'smem constant byte address 0x4 - core index']
  #allocation1 [shape = 'u32[144,128]{1,0:T(1,128)}', space=vmem, size = 0x12000, scoped, tag = 'internal scratch']
  %s0 = inlined_call_operand.hbm [shape: bf16[16,26], index: 0, kind: input, shape index: {}]
  %s1 = inlined_call_operand.hbm [shape: bf16[26,128], index: 1, kind: input, shape index: {}]
  %s2 = inlined_call_operand.vmem [shape: f32[1,128], index: 2, kind: input, shape index: {}]
  %s3 = inlined_call_operand.hbm [shape: bf16[128,128], index: 3, kind: input, shape index: {}]
  %s4 = inlined_call_operand.vmem [shape: f32[1,128], index: 4, kind: input, shape index: {}]
  %s5 = inlined_call_operand.hbm [shape: bf16[128,128], index: 5, kind: input, shape index: {}]
  %s6 = inlined_call_operand.vmem [shape: f32[1,128], index: 6, kind: input, shape index: {}]
  %s7 = inlined_call_operand.hbm [shape: f32[16,128], index: 7, kind: output, shape index: {}]
  %s8 = sld [smem:[#allocation0]]
  $region54: #{tpu_custom_call.1} parent=0
    _
  %s10 = ssub.s32 1, %s8
  %s11 = scalar_select 0, %s10, %s8
  $region1: #{tpu_custom_call.1} parent=0
    #allocation2 [shape = 'u8[4096]{0}', space=vmem, size = 0x1000, scoped, tag = 'input window, operand 0, single buffered']
    #allocation3 [shape = 's32[1]{0}', space=sflag, size = 0x4, scoped, tag = 'scoped memory for tpu_custom_call.1']
    #allocation4 [shape = 's32[1]{0}', space=sflag, size = 0x4, scoped, tag = 'scoped memory for tpu_custom_call.1']
    #allocation5 [shape = 'u8[8192]{0}', space=vmem, size = 0x2000, scoped, tag = 'input window, operand 1, single buffered']
    #allocation6 [shape = 's32[1]{0}', space=sflag, size = 0x4, scoped, tag = 'scoped memory for tpu_custom_call.1']
    #allocation7 [shape = 'u8[32768]{0}', space=vmem, size = 0x8000, scoped, tag = 'input window, operand 3, single buffered']
    #allocation8 [shape = 'u8[32768]{0}', space=vmem, size = 0x8000, scoped, tag = 'input window, operand 5, single buffered']
    #allocation9 [shape = 's32[1]{0}', space=sflag, size = 0x4, scoped, tag = 'scoped memory for tpu_custom_call.1']
    #allocation10 [shape = 'u8[8192]{0}', space=vmem, size = 0x2000, scoped, tag = 'output window, operand 0, single buffered']
    %12 = vsyncpa [#allocation3], 0
    %13 = vsyncpa [#allocation6], 0
    %14 = vsyncpa [#allocation9], 0
    %15 = vsyncpa [#allocation4], 0
    // Predicated region
    $region2: #{tpu_custom_call.1} parent=1 // pred_check
      _
    $region3: #{tpu_custom_call.1} parent=1 // pred_check_branch
      %17 = sbr.rel (0) target = $region5
    $region4: #{tpu_custom_call.1} parent=1 // pred_region
      %s19 = ssub.s32 128, 128
      %20 = vsyncadd [#allocation3], %s19
      %s21 = sshll.u32 [#allocation2], 4
      %s22 = int_to_ptr.vmem [resolvable:$true] %s21
      %27 = dma.hbm_to_vmem [thread:$0]  %s0, 128, %s22, [#allocation3], 64, 64, 4
    $region5: #{tpu_custom_call.1} parent=1 // pred_fallthru
      _
    // Predicated region
    $region6: #{tpu_custom_call.1} parent=1 // pred_check
      _
    $region7: #{tpu_custom_call.1} parent=1 // pred_check_branch
      %29 = sbr.rel (0) target = $region9
    $region8: #{tpu_custom_call.1} parent=1 // pred_region
      %s31 = ssub.s32 256, 256
      %32 = vsyncadd [#allocation6], %s31
      %s33 = sshll.u32 [#allocation5], 4
      %s34 = int_to_ptr.vmem [resolvable:$true] %s33
      %39 = dma.hbm_to_vmem [thread:$0]  %s1, 256, %s34, [#allocation6], 64, 64, 4
    $region9: #{tpu_custom_call.1} parent=1 // pred_fallthru
      _
    // Predicated region
    $region10: #{tpu_custom_call.1} parent=1 // pred_check
      _
    $region11: #{tpu_custom_call.1} parent=1 // pred_check_branch
      %41 = sbr.rel (0) target = $region13
    $region12: #{tpu_custom_call.1} parent=1 // pred_region
      _
    $region13: #{tpu_custom_call.1} parent=1 // pred_fallthru
      _
    // Predicated region
    $region14: #{tpu_custom_call.1} parent=1 // pred_check
      _
    $region15: #{tpu_custom_call.1} parent=1 // pred_check_branch
      %43 = sbr.rel (0) target = $region17
    $region16: #{tpu_custom_call.1} parent=1 // pred_region
      %s45 = ssub.s32 1024, 1024
      %46 = vsyncadd [#allocation6], %s45
      %s47 = sshll.u32 [#allocation7], 4
      %s48 = int_to_ptr.vmem [resolvable:$true] %s47
      %53 = dma.hbm_to_vmem [thread:$0]  %s3, 1024, %s48, [#allocation6], 64, 64, 4
    $region17: #{tpu_custom_call.1} parent=1 // pred_fallthru
      _
    // Predicated region
    $region18: #{tpu_custom_call.1} parent=1 // pred_check
      _
    $region19: #{tpu_custom_call.1} parent=1 // pred_check_branch
      %55 = sbr.rel (0) target = $region21
    $region20: #{tpu_custom_call.1} parent=1 // pred_region
      _
    $region21: #{tpu_custom_call.1} parent=1 // pred_fallthru
      _
    // Predicated region
    $region22: #{tpu_custom_call.1} parent=1 // pred_check
      _
    $region23: #{tpu_custom_call.1} parent=1 // pred_check_branch
      %57 = sbr.rel (0) target = $region25
    $region24: #{tpu_custom_call.1} parent=1 // pred_region
      %s59 = ssub.s32 1024, 1024
      %60 = vsyncadd [#allocation9], %s59
      %s61 = sshll.u32 [#allocation8], 4
      %s62 = int_to_ptr.vmem [resolvable:$true] %s61
      %67 = dma.hbm_to_vmem [thread:$0]  %s5, 1024, %s62, [#allocation9], 64, 64, 4
    $region25: #{tpu_custom_call.1} parent=1 // pred_fallthru
      _
    // Predicated region
    $region26: #{tpu_custom_call.1} parent=1 // pred_check
      _
    $region27: #{tpu_custom_call.1} parent=1 // pred_check_branch
      %69 = sbr.rel (0) target = $region29
    $region28: #{tpu_custom_call.1} parent=1 // pred_region
      _
    $region29: #{tpu_custom_call.1} parent=1 // pred_fallthru
      _
    // Predicated region
    $region30: #{tpu_custom_call.1} parent=1 // pred_check
      _
    $region31: #{tpu_custom_call.1} parent=1 // pred_check_branch
      %71 = sbr.rel (0) target = $region33
    $region32: #{tpu_custom_call.1} parent=1 // pred_region
      %72 = dma.done [#allocation3], 128
    $region33: #{tpu_custom_call.1} parent=1 // pred_fallthru
      _
    // Predicated region
    $region34: #{tpu_custom_call.1} parent=1 // pred_check
      _
    $region35: #{tpu_custom_call.1} parent=1 // pred_check_branch
      %74 = sbr.rel (0) target = $region37
    $region36: #{tpu_custom_call.1} parent=1 // pred_region
      %75 = dma.done [#allocation6], 256
    $region37: #{tpu_custom_call.1} parent=1 // pred_fallthru
      _
    // Predicated region
    $region38: #{tpu_custom_call.1} parent=1 // pred_check
      _
    $region39: #{tpu_custom_call.1} parent=1 // pred_check_branch
      %77 = sbr.rel (0) target = $region41
    $region40: #{tpu_custom_call.1} parent=1 // pred_region
      %78 = dma.done [#allocation6], 1024
    $region41: #{tpu_custom_call.1} parent=1 // pred_fallthru
      _
    // Predicated region
    $region42: #{tpu_custom_call.1} parent=1 // pred_check
      _
    $region43: #{tpu_custom_call.1} parent=1 // pred_check_branch
      %80 = sbr.rel (0) target = $region45
    $region44: #{tpu_custom_call.1} parent=1 // pred_region
      %81 = dma.done [#allocation9], 1024
    $region45: #{tpu_custom_call.1} parent=1 // pred_fallthru
      _
    %v83 = vld [vmem:[#allocation2] sm:$0xf]
    %v84 = vld [vmem:[#allocation2 + $0x4] sm:$0xf]
    %v85 = vld [vmem:[#allocation5] sm:$0xf]
    %v86 = vld [vmem:[#allocation5 + $0x4] sm:$0xf]
    %v87 = vld [vmem:[#allocation5 + $0x8] sm:$0xf]
    %v88 = vld [vmem:[#allocation5 + $0xc] sm:$0x1]
    %v89 = vld [vmem:[%s2] sm:$0x1]
    %v91 = vlaneseq
    %v92 = vshrl.u32 %v91, 7
    %v93 = vsub.s32 0, %v92
    %v94 = vrot.slane %v89, %v93
    %v98 = vunpack.c.l.b16 %v83
    %v99 = vunpack.c.l.b16 %v84
    %v100 = vpack.c.b16 %v99, %v98
    %v105 = vunpack.c.l.b16 %v85
    %v106 = vunpack.c.l.b16 %v86
    %v107 = vunpack.c.l.b16 %v87
    %v108 = vunpack.c.l.b16 %v88
    %v109 = vpack.c.b16 %v106, %v105
    %v110 = vpack.c.b16 %v108, %v107
    %vm112 = vcmask 211968
    %v114 = vsel %vm112, %v100, 0
    %vm116 = vcmask 1044480
    %v118 = vsel %vm116, %v110, 0
    %120 = vmatprep.subr.bf16.mxu0 0
    %121 = vmatpush1.bf16.msra.mxu0 %v109
    %122 = vmatprep.subr.bf16.mxu0 0
    %123 = vmatpush1.bf16.msra.mxu0 %v118
    %124 = vmatprep.subr.bf16.mxu0 0
    %125 = vmatpush1.bf16.msra.mxu0 0
    %126 = vmatprep.subr.bf16.mxu0 0
    %127 = vmatpush1.bf16.msra.mxu0 0
    %128 = vmatprep.subr.bf16.mxu0 0
    %129 = vmatpush1.bf16.msra.mxu0 0
    %130 = vmatprep.subr.bf16.mxu0 0
    %131 = vmatpush1.bf16.msra.mxu0 0
    %132 = vmatprep.subr.bf16.mxu0 0
    %133 = vmatpush1.bf16.msra.mxu0 0
    %134 = vmatprep.subr.bf16.mxu0 0
    %135 = vmatpush1.bf16.msra.mxu0 0
    %136 = vmatprep.subr.bf16.mxu0 0
    %137 = vmatpush1.bf16.msra.mxu0 0
    %138 = vmatprep.subr.bf16.mxu0 0
    %139 = vmatpush1.bf16.msra.mxu0 0
    %140 = vmatprep.subr.bf16.mxu0 0
    %141 = vmatpush1.bf16.msra.mxu0 0
    %142 = vmatprep.subr.bf16.mxu0 0
    %143 = vmatpush1.bf16.msra.mxu0 0
    %144 = vmatprep.subr.bf16.mxu0 0
    %145 = vmatpush1.bf16.msra.mxu0 0
    %146 = vmatprep.subr.bf16.mxu0 0
    %147 = vmatpush1.bf16.msra.mxu0 0
    %148 = vmatprep.subr.bf16.mxu0 0
    %149 = vmatpush1.bf16.msra.mxu0 0
    %150 = vmatprep.subr.bf16.mxu0 0
    %151 = vmatpush1.bf16.msra.mxu0 0
    %152 = vmatprep.mubr.bf16.mxu0 0
    %153 = vmatmul.mubr.bf16.gmra.mrb[0].mxu0 %v114
    %v154 = vpop.f32.mrb[0].mxu0
    %v155 = vadd.f32 %v94, %v154
    %v156 = vpop.f32.mrb[0].mxu0
    %v157 = vpop.f32.mrb[0].mxu0
    %v158 = vadd.f32 %v94, %v157
    %v159 = vpop.f32.mrb[0].mxu0
    %160 = vdwg.mxu0
    %v161 = vmax.f32 %v155, 0.0
    %v162 = vmax.f32 %v158, 0.0
    %v163 = vpack.c.bf16 %v162, %v161
    %v164 = vld [vmem:[#allocation7] sm:$0xf]
    %v165 = vld [vmem:[#allocation7 + $0x4] sm:$0xf]
    %v166 = vld [vmem:[#allocation7 + $0x8] sm:$0xf]
    %v167 = vld [vmem:[#allocation7 + $0xc] sm:$0xf]
    %v168 = vld [vmem:[#allocation7 + $0x10] sm:$0xf]
    %v169 = vld [vmem:[#allocation7 + $0x14] sm:$0xf]
    %v170 = vld [vmem:[#allocation7 + $0x18] sm:$0xf]
    %v171 = vld [vmem:[#allocation7 + $0x1c] sm:$0xf]
    %v172 = vld [vmem:[#allocation7 + $0x20] sm:$0xf]
    %v173 = vld [vmem:[#allocation7 + $0x24] sm:$0xf]
    %v174 = vld [vmem:[#allocation7 + $0x28] sm:$0xf]
    %v175 = vld [vmem:[#allocation7 + $0x2c] sm:$0xf]
    %v176 = vld [vmem:[#allocation7 + $0x30] sm:$0xf]
    %v177 = vld [vmem:[#allocation7 + $0x34] sm:$0xf]
    %v178 = vld [vmem:[#allocation7 + $0x38] sm:$0xf]
    %v179 = vld [vmem:[#allocation7 + $0x3c] sm:$0xf]
    %v180 = vld [vmem:[%s4] sm:$0x1]
    %v182 = vlaneseq
    %v183 = vshrl.u32 %v182, 7
    %v184 = vsub.s32 0, %v183
    %v185 = vrot.slane %v180, %v184
    %v203 = vunpack.c.l.b16 %v164
    %v204 = vunpack.c.l.b16 %v165
    %v205 = vunpack.c.l.b16 %v166
    %v206 = vunpack.c.l.b16 %v167
    %v207 = vunpack.c.l.b16 %v168
    %v208 = vunpack.c.l.b16 %v169
    %v209 = vunpack.c.l.b16 %v170
    %v210 = vunpack.c.l.b16 %v171
    %v211 = vunpack.c.l.b16 %v172
    %v212 = vunpack.c.l.b16 %v173
    %v213 = vunpack.c.l.b16 %v174
    %v214 = vunpack.c.l.b16 %v175
    %v215 = vunpack.c.l.b16 %v176
    %v216 = vunpack.c.l.b16 %v177
    %v217 = vunpack.c.l.b16 %v178
    %v218 = vunpack.c.l.b16 %v179
    %v219 = vpack.c.b16 %v204, %v203
    %v220 = vpack.c.b16 %v206, %v205
    %v221 = vpack.c.b16 %v208, %v207
    %v222 = vpack.c.b16 %v210, %v209
    %v223 = vpack.c.b16 %v212, %v211
    %v224 = vpack.c.b16 %v214, %v213
    %v225 = vpack.c.b16 %v216, %v215
    %v226 = vpack.c.b16 %v218, %v217
    %235 = vmatprep.subr.bf16.mxu0 0
    %236 = vmatpush1.bf16.msra.mxu0 %v219
    %237 = vmatprep.subr.bf16.mxu0 0
    %238 = vmatpush1.bf16.msra.mxu0 %v220
    %239 = vmatprep.subr.bf16.mxu0 0
    %240 = vmatpush1.bf16.msra.mxu0 %v221
    %241 = vmatprep.subr.bf16.mxu0 0
    %242 = vmatpush1.bf16.msra.mxu0 %v222
    %243 = vmatprep.subr.bf16.mxu0 0
    %244 = vmatpush1.bf16.msra.mxu0 %v223
    %245 = vmatprep.subr.bf16.mxu0 0
    %246 = vmatpush1.bf16.msra.mxu0 %v224
    %247 = vmatprep.subr.bf16.mxu0 0
    %248 = vmatpush1.bf16.msra.mxu0 %v225
    %249 = vmatprep.subr.bf16.mxu0 0
    %250 = vmatpush1.bf16.msra.mxu0 %v226
    %251 = vmatprep.subr.bf16.mxu0 0
    %252 = vmatpush1.bf16.msra.mxu0 0
    %253 = vmatprep.subr.bf16.mxu0 0
    %254 = vmatpush1.bf16.msra.mxu0 0
    %255 = vmatprep.subr.bf16.mxu0 0
    %256 = vmatpush1.bf16.msra.mxu0 0
    %257 = vmatprep.subr.bf16.mxu0 0
    %258 = vmatpush1.bf16.msra.mxu0 0
    %259 = vmatprep.subr.bf16.mxu0 0
    %260 = vmatpush1.bf16.msra.mxu0 0
    %261 = vmatprep.subr.bf16.mxu0 0
    %262 = vmatpush1.bf16.msra.mxu0 0
    %263 = vmatprep.subr.bf16.mxu0 0
    %264 = vmatpush1.bf16.msra.mxu0 0
    %265 = vmatprep.subr.bf16.mxu0 0
    %266 = vmatpush1.bf16.msra.mxu0 0
    %267 = vmatprep.mubr.bf16.mxu0 0
    %268 = vmatmul.mubr.bf16.gmra.mrb[0].mxu0 %v163
    %v269 = vpop.f32.mrb[0].mxu0
    %v270 = vadd.f32 %v185, %v269
    %v271 = vpop.f32.mrb[0].mxu0
    %v272 = vpop.f32.mrb[0].mxu0
    %v273 = vadd.f32 %v185, %v272
    %v274 = vpop.f32.mrb[0].mxu0
    %275 = vdwg.mxu0
    %v276 = vmax.f32 %v270, 0.0
    %v277 = vmax.f32 %v273, 0.0
    %v278 = vpack.c.bf16 %v277, %v276
    %v279 = vld [vmem:[#allocation8] sm:$0xf]
    %v280 = vld [vmem:[#allocation8 + $0x4] sm:$0xf]
    %v281 = vld [vmem:[#allocation8 + $0x8] sm:$0xf]
    %v282 = vld [vmem:[#allocation8 + $0xc] sm:$0xf]
    %v283 = vld [vmem:[#allocation8 + $0x10] sm:$0xf]
    %v284 = vld [vmem:[#allocation8 + $0x14] sm:$0xf]
    %v285 = vld [vmem:[#allocation8 + $0x18] sm:$0xf]
    %v286 = vld [vmem:[#allocation8 + $0x1c] sm:$0xf]
    %v287 = vld [vmem:[#allocation8 + $0x20] sm:$0xf]
    %v288 = vld [vmem:[#allocation8 + $0x24] sm:$0xf]
    %v289 = vld [vmem:[#allocation8 + $0x28] sm:$0xf]
    %v290 = vld [vmem:[#allocation8 + $0x2c] sm:$0xf]
    %v291 = vld [vmem:[#allocation8 + $0x30] sm:$0xf]
    %v292 = vld [vmem:[#allocation8 + $0x34] sm:$0xf]
    %v293 = vld [vmem:[#allocation8 + $0x38] sm:$0xf]
    %v294 = vld [vmem:[#allocation8 + $0x3c] sm:$0xf]
    %v295 = vld [vmem:[%s6] sm:$0x1]
    %v297 = vlaneseq
    %v298 = vshrl.u32 %v297, 7
    %v299 = vsub.s32 0, %v298
    %v300 = vrot.slane %v295, %v299
    %v318 = vunpack.c.l.b16 %v279
    %v319 = vunpack.c.l.b16 %v280
    %v320 = vunpack.c.l.b16 %v281
    %v321 = vunpack.c.l.b16 %v282
    %v322 = vunpack.c.l.b16 %v283
    %v323 = vunpack.c.l.b16 %v284
    %v324 = vunpack.c.l.b16 %v285
    %v325 = vunpack.c.l.b16 %v286
    %v326 = vunpack.c.l.b16 %v287
    %v327 = vunpack.c.l.b16 %v288
    %v328 = vunpack.c.l.b16 %v289
    %v329 = vunpack.c.l.b16 %v290
    %v330 = vunpack.c.l.b16 %v291
    %v331 = vunpack.c.l.b16 %v292
    %v332 = vunpack.c.l.b16 %v293
    %v333 = vunpack.c.l.b16 %v294
    %v334 = vpack.c.b16 %v319, %v318
    %v335 = vpack.c.b16 %v321, %v320
    %v336 = vpack.c.b16 %v323, %v322
    %v337 = vpack.c.b16 %v325, %v324
    %v338 = vpack.c.b16 %v327, %v326
    %v339 = vpack.c.b16 %v329, %v328
    %v340 = vpack.c.b16 %v331, %v330
    %v341 = vpack.c.b16 %v333, %v332
    %350 = vmatprep.subr.bf16.mxu0 0
    %351 = vmatpush1.bf16.msra.mxu0 %v334
    %352 = vmatprep.subr.bf16.mxu0 0
    %353 = vmatpush1.bf16.msra.mxu0 %v335
    %354 = vmatprep.subr.bf16.mxu0 0
    %355 = vmatpush1.bf16.msra.mxu0 %v336
    %356 = vmatprep.subr.bf16.mxu0 0
    %357 = vmatpush1.bf16.msra.mxu0 %v337
    %358 = vmatprep.subr.bf16.mxu0 0
    %359 = vmatpush1.bf16.msra.mxu0 %v338
    %360 = vmatprep.subr.bf16.mxu0 0
    %361 = vmatpush1.bf16.msra.mxu0 %v339
    %362 = vmatprep.subr.bf16.mxu0 0
    %363 = vmatpush1.bf16.msra.mxu0 %v340
    %364 = vmatprep.subr.bf16.mxu0 0
    %365 = vmatpush1.bf16.msra.mxu0 %v341
    %366 = vmatprep.subr.bf16.mxu0 0
    %367 = vmatpush1.bf16.msra.mxu0 0
    %368 = vmatprep.subr.bf16.mxu0 0
    %369 = vmatpush1.bf16.msra.mxu0 0
    %370 = vmatprep.subr.bf16.mxu0 0
    %371 = vmatpush1.bf16.msra.mxu0 0
    %372 = vmatprep.subr.bf16.mxu0 0
    %373 = vmatpush1.bf16.msra.mxu0 0
    %374 = vmatprep.subr.bf16.mxu0 0
    %375 = vmatpush1.bf16.msra.mxu0 0
    %376 = vmatprep.subr.bf16.mxu0 0
    %377 = vmatpush1.bf16.msra.mxu0 0
    %378 = vmatprep.subr.bf16.mxu0 0
    %379 = vmatpush1.bf16.msra.mxu0 0
    %380 = vmatprep.subr.bf16.mxu0 0
    %381 = vmatpush1.bf16.msra.mxu0 0
    %382 = vmatprep.mubr.bf16.mxu0 0
    %383 = vmatmul.mubr.bf16.gmra.mrb[0].mxu0 %v278
    %v384 = vpop.f32.mrb[0].mxu0
    %v385 = vadd.f32 %v300, %v384
    %v386 = vpop.f32.mrb[0].mxu0
    %v387 = vpop.f32.mrb[0].mxu0
    %v388 = vadd.f32 %v300, %v387
    %v389 = vpop.f32.mrb[0].mxu0
    %390 = vdwg.mxu0
    %v391 = vmax.f32 %v385, -5.0
    %v392 = vmax.f32 %v388, -5.0
    %v393 = vmin.f32 %v391, 5.0
    %v394 = vmin.f32 %v392, 5.0
    %v395 = vtanh.pop %v385
    %v396 = vtanh.pop %v388
    %v397 = vmul.f32 %v395, 1.442695
    %v398 = vpow.pop %v397
    %v399 = vmul.f32 %v396, 1.442695
    %v400 = vpow.pop %v399
    %v401 = vlaneseq
    %v402 = vand.u32 %v401, 127
    %vm403 = vcmp.lt.s32.totalorder %v402, 50
    %v404 = vsel %vm403, 1, 0
    %vm405 = vcmp.eq.s32.totalorder %v404, 1
    %v406 = vsel %vm405, %v393, %v398
    %v407 = vsel %vm405, %v394, %v400
    %408 = vst [vmem:[#allocation10] sm:$0xff] %v406
    %409 = vst [vmem:[#allocation10 + $0x8] sm:$0xff] %v407
    // Predicated region
    $region46: #{tpu_custom_call.1} parent=1 // pred_check
      _
    $region47: #{tpu_custom_call.1} parent=1 // pred_check_branch
      %411 = sbr.rel (0) target = $region49
    $region48: #{tpu_custom_call.1} parent=1 // pred_region
      %s413 = ssub.s32 256, 256
      %414 = vsyncadd [#allocation4], %s413
      %s415 = sshll.u32 [#allocation10], 4
      %s416 = int_to_ptr.vmem [resolvable:$true] %s415
      %421 = dma.vmem_to_hbm [thread:$0]  %s416, 256, %s7, [#allocation4], 128, 128, 8
    $region49: #{tpu_custom_call.1} parent=1 // pred_fallthru
      _
    // Predicated region
    $region50: #{tpu_custom_call.1} parent=1 // pred_check
      _
    $region51: #{tpu_custom_call.1} parent=1 // pred_check_branch
      %423 = sbr.rel (0) target = $region53
    $region52: #{tpu_custom_call.1} parent=1 // pred_region
      %424 = dma.done [#allocation4], 256
    $region53: #{tpu_custom_call.1} parent=1 // pred_fallthru
      _
    %425 = vsyncpa [#allocation3], 1
    %426 = vsyncpa [#allocation6], 1
    %427 = vsyncpa [#allocation9], 1
    %428 = vsyncpa [#allocation4], 1

</llo_original>
